<compile_context>
chip_gen: v5e
topology: v5e:2x2
jax: 0.10.0
libtpu: 0.0.40
codegen_flags: <defaults>
</compile_context>

<pallas_src>
import functools

import jax
import jax.numpy as jnp
from jax.experimental import pallas as pl
from jax.experimental.pallas import tpu as pltpu


# ----------------------------------------------------------------------------
# Fused kernel: conv -> LeakyReLU (x nb_conv) -> optional MaxPool2d(2,2)
# ----------------------------------------------------------------------------
def _fused_kernel(*refs, spatial, nb_per_step, kernel_sizes, paddings,
                  negative_slope, mode):
    """refs = (x_ref, w_packed_0, b_0, w_packed_1, b_1, ..., [sel_ref], o_ref)

    x_ref      : (1, Cin_p0, S)        S = nb_per_step*H*W, channels on sublanes
    w_packed_l : (Cout_l, k*k*Cin_p_l) tap-major packed weights (zero cols for pad)
    b_l        : (Cout_l, 1)
    sel_ref    : (S, S_out)            one-hot pool-compaction matrix (down only)
    o_ref      : (1, Cout, S_out)      lane-dense store
    """
    H, W = spatial
    HW = H * W
    S = nb_per_step * HW

    x_ref = refs[0]
    o_ref = refs[-1]
    if mode == "down":
        sel_ref = refs[-2]
        layer_refs = refs[1:-2]
    else:
        layer_refs = refs[1:-1]
    nb_conv = len(layer_refs) // 2

    x = x_ref[0].astype(jnp.float32)                         # (Cin_p0, S)

    # Per-image edge masks on the flattened lane index R = n*H*W + h*W + w.
    lane = jax.lax.broadcasted_iota(jnp.int32, (1, S), 1)
    w_pos = lane % W
    r_img = lane % HW
    at_w_lo = w_pos == 0
    at_w_hi = w_pos == W - 1
    at_h_lo = r_img < W
    at_h_hi = r_img >= HW - W

    def clamp_shift(y, d, lo_mask, hi_mask, step):
        # y[R] <- y[R + d*step] with per-image replicate (edge-clamp) semantics,
        # applied one unit step at a time (exact for any |d|).  Lanes that wrap
        # across image boundaries in the circular roll are overwritten by the
        # edge-clamp select.
        # TODO(synk): for k >= 5 a single roll by |d|*step plus one
        # edge-broadcast select would cut the XLU work from ~k^3 to ~k^2.
        for _ in range(abs(d)):
            s = step if d > 0 else -step
            rolled = pltpu.roll(y, (-s) % S, 1)               # rolled[R] == y[R + s]
            y = jnp.where(hi_mask if d > 0 else lo_mask, y, rolled)
        return y

    mask_cache = {}
    for l in range(nb_conv):
        w_packed = layer_refs[2 * l][...].astype(jnp.float32)   # (Cout, k*k*Cin_p)
        b = layer_refs[2 * l + 1][...].astype(jnp.float32)      # (Cout, 1)
        k, p = kernel_sizes[l], paddings[l]
        cin_p = w_packed.shape[1] // (k * k)

        # Zero-pad channels so every tap chunk is a whole 8-sublane tile
        # (weight columns for padded channels are zero, so values are inert).
        if x.shape[0] < cin_p:
            x = jnp.concatenate(
                [x, jnp.zeros((cin_p - x.shape[0], S), jnp.float32)], axis=0)

        # Hoisted edge masks at the full tensor shape: JAX does not CSE
        # broadcast_in_dim, so build them once per distinct Cin_p and reuse.
        if cin_p not in mask_cache:
            mask_cache[cin_p] = tuple(
                jnp.broadcast_to(m, (cin_p, S))
                for m in (at_w_lo, at_w_hi, at_h_lo, at_h_hi))
        wlo, whi, hlo, hhi = mask_cache[cin_p]

        # Build the k*k replicate-shifted copies of the input and fold the tap
        # summation into a single MXU contraction of K = k*k*Cin_p.
        taps = []
        for kh in range(k):
            for kw in range(k):
                xt = clamp_shift(x, kw - p, wlo, whi, 1)
                xt = clamp_shift(xt, kh - p, hlo, hhi, W)
                taps.append(xt)
        x_taps = jnp.concatenate(taps, axis=0)                # (k*k*Cin_p, S)

        y = jnp.dot(w_packed, x_taps,
                    preferred_element_type=jnp.float32) + b   # (Cout, S)
        x = jnp.where(y >= 0, y, negative_slope * y)          # LeakyReLU / ReLU

    if mode == "down":                                        # MaxPool2d(2, 2)
        # Lane-major 2x2 max: max over (w, w+1), then over (h, h+1).
        m = jnp.maximum(x, pltpu.roll(x, (-1) % S, 1))
        m = jnp.maximum(m, pltpu.roll(m, (-W) % S, 1))
        # Compact the (even-h, even-w) lanes with a one-hot selection matmul:
        # exact, keeps the store lane-dense, avoids reshape relayouts.
        x = jnp.dot(m, sel_ref[...], preferred_element_type=jnp.float32)

    o_ref[0] = x.astype(o_ref.dtype)                          # lane-dense store


# ----------------------------------------------------------------------------
# Wrapper: PyTorch-style NCHW in / NCHW out, single pallas_call
# ----------------------------------------------------------------------------
def _round_up(v, m):
    return (v + m - 1) // m * m


def multiple_convs_forward(x_nchw, params, paddings, kernel_sizes=None,
                           mode="down", relu_type="leaky"):
    """MultipleConvs.forward.  params = [(w_hwio (k,k,Cin,Cout), b (Cout,)), ...]."""
    x_nchw = x_nchw.astype(jnp.float32)
    N, c, H, W = x_nchw.shape
    HW = H * W
    negative_slope = 0.1 if relu_type == "leaky" else 0.0
    if kernel_sizes is None:
        kernel_sizes = [w.shape[0] for w, _ in params]

    ho, wo = (H // 2, W // 2) if mode == "down" else (H, W)
    s_out_img = ho * wo

    # Grid: fold the batch into as few steps as possible.  One step for tiny
    # batches (single-TC v5e/v6e pay no per-step overhead); two parallel steps
    # when each step's output stays a multiple of 128 lanes (v7x dual TC).
    # TODO(synk): large images need an extra spatial grid axis (with a
    # (k-1)//2-row halo) to bound the k^2-inflated X_taps against v7x's 64 MiB
    # VMEM (and an explicit vmem_limit_bytes).
    if N % 2 == 0 and ((N // 2) * s_out_img) % 128 == 0:
        n_steps = 2
    else:
        n_steps = 1
    nb = N // n_steps                      # images per grid step
    S = nb * HW
    S_out = nb * s_out_img

    # Input: (N, C, H, W) -> (n_steps, Cin_p0, nb*H*W)   (layout plumbing only).
    cin0 = c
    cin_p0 = _round_up(cin0, 8)
    x = x_nchw.reshape(n_steps, nb, cin0, HW)
    x = jnp.transpose(x, (0, 2, 1, 3)).reshape(n_steps, cin0, S)
    if cin_p0 > cin0:
        x = jnp.pad(x, ((0, 0), (0, cin_p0 - cin0), (0, 0)))

    inputs = [x]
    in_specs = [pl.BlockSpec((1, cin_p0, S), lambda g: (g, 0, 0))]

    for (w, b), k, p in zip(params, kernel_sizes, paddings):
        kh, kw, ci, co = w.shape
        assert kh == kw == k and ci == c
        # TODO(synk): only stride-1 'same' convolutions (2*p == k-1) are
        # supported by the fused shift-based replicate padding.
        assert 2 * p == k - 1, "only 'same' replicate-padded convs supported"
        cin_p = _round_up(ci, 8)
        w = w.astype(jnp.float32)
        if cin_p > ci:
            w = jnp.pad(w, ((0, 0), (0, 0), (0, cin_p - ci), (0, 0)))
        # (k,k,Cin_p,Cout) -> (Cout, k*k*Cin_p); contraction index is
        # (kh*k + kw)*Cin_p + ci, matching the in-kernel tap concat order.
        w_packed = jnp.transpose(w, (3, 0, 1, 2)).reshape(co, k * k * cin_p)
        inputs += [w_packed, b.astype(jnp.float32).reshape(co, 1)]
        in_specs += [pl.BlockSpec((co, k * k * cin_p), lambda g: (0, 0)),
                     pl.BlockSpec((co, 1), lambda g: (0, 0))]
        c = co

    if mode == "down":
        # One-hot (even-h, even-w) lane-selection matrix for pool compaction:
        # sel[R, q] = 1 iff lane R is the top-left element of pooled output q.
        q = jnp.arange(S_out)
        n_loc = q // s_out_img
        rem = q % s_out_img
        src = n_loc * HW + 2 * (rem // wo) * W + 2 * (rem % wo)
        sel = (jnp.arange(S)[:, None] == src[None, :]).astype(jnp.float32)
        inputs.append(sel)
        in_specs.append(pl.BlockSpec((S, S_out), lambda g: (0, 0)))

    kernel = functools.partial(
        _fused_kernel, spatial=(H, W), nb_per_step=nb,
        kernel_sizes=tuple(kernel_sizes), paddings=tuple(paddings),
        negative_slope=negative_slope, mode=mode)

    out = pl.pallas_call(
        kernel,
        out_shape=jax.ShapeDtypeStruct((n_steps, c, S_out), jnp.float32),
        grid=(n_steps,),
        in_specs=in_specs,
        out_specs=pl.BlockSpec((1, c, S_out), lambda g: (g, 0, 0)),
        compiler_params=pltpu.CompilerParams(
            dimension_semantics=("parallel",)),
    )(*inputs)

    # (n_steps, Cout, nb*ho*wo) -> (N, Cout, ho, wo)   (layout plumbing only).
    out = out.reshape(n_steps, c, nb, ho, wo)
    return jnp.transpose(out, (0, 2, 1, 3, 4)).reshape(N, c, ho, wo)


def init_params(key, in_channels, out_channels, kernel_sizes):
    """Deterministic Conv2d-style (uniform +-1/sqrt(fan_in)) init, HWIO weights."""
    params = []
    for i in range(len(kernel_sizes)):
        key, k_w, k_b = jax.random.split(key, 3)
        k, cin, cout = kernel_sizes[i], in_channels[i], out_channels[i]
        bound = 1.0 / float(cin * k * k) ** 0.5
        w = jax.random.uniform(k_w, (k, k, cin, cout), jnp.float32, -bound, bound)
        b = jax.random.uniform(k_b, (cout,), jnp.float32, -bound, bound)
        params.append((w, b))
    return params


# ----------------------------------------------------------------------------
# Pure-JAX reference (correctness check only)
# ----------------------------------------------------------------------------
def _reference_forward(x_nchw, params, paddings, mode="down", relu_type="leaky"):
    slope = 0.1 if relu_type == "leaky" else 0.0
    x = jnp.transpose(x_nchw, (0, 2, 3, 1)).astype(jnp.float32)
    for (w, b), p in zip(params, paddings):
        xp = jnp.pad(x, ((0, 0), (p, p), (p, p), (0, 0)), mode="edge")
        y = jax.lax.conv_general_dilated(
            xp, w, (1, 1), "VALID",
            dimension_numbers=("NHWC", "HWIO", "NHWC")) + b
        x = jnp.where(y >= 0, y, slope * y)
    if mode == "down":
        x = jax.lax.reduce_window(x, -jnp.inf, jax.lax.max,
                                  (1, 2, 2, 1), (1, 2, 2, 1), "VALID")
    return jnp.transpose(x, (0, 3, 1, 2))


if __name__ == "__main__":
    key = jax.random.PRNGKey(0)
    kx, kp = jax.random.split(key)

    # Module config: nb_conv=2, mode='down', relu_type='leaky'
    in_channels = [4, 8]
    out_channels = [8, 8]
    kernel_sizes = [3, 3]
    paddings = [1, 1]

    N, C, H, W = 2, 4, 16, 16
    x = jax.random.normal(kx, (N, C, H, W), jnp.float32)
    params = init_params(kp, in_channels, out_channels, kernel_sizes)

    # mode='down' (conv -> leaky -> conv -> leaky -> maxpool), single grid step.
    out = multiple_convs_forward(x, params, paddings, kernel_sizes=kernel_sizes,
                                 mode="down", relu_type="leaky")
    out = jax.block_until_ready(out)
    assert out.shape == (N, out_channels[-1], H // 2, W // 2), out.shape
    ref = _reference_forward(x, params, paddings, mode="down", relu_type="leaky")
    assert jnp.allclose(out, ref, atol=1e-4, rtol=1e-4), \
        float(jnp.max(jnp.abs(out - ref)))

    # mode='up' (no pool) — also exercises the 2-parallel-step grid path.
    out_up = multiple_convs_forward(x, params, paddings, kernel_sizes=kernel_sizes,
                                    mode="up", relu_type="leaky")
    out_up = jax.block_until_ready(out_up)
    assert out_up.shape == (N, out_channels[-1], H, W), out_up.shape
    ref_up = _reference_forward(x, params, paddings, mode="up", relu_type="leaky")
    assert jnp.allclose(out_up, ref_up, atol=1e-4, rtol=1e-4), \
        float(jnp.max(jnp.abs(out_up - ref_up)))

    print("KERNEL_OK")
</pallas_src>

<mosaic_0001>
module attributes {stable_mosaic.version = 11 : i64} {
  func.func @_fused_kernel(%arg0: i32, %arg1: memref<1x8x512xf32, #tpu.memory_space<vmem>>, %arg2: memref<8x72xf32, #tpu.memory_space<vmem>>, %arg3: memref<8x1xf32, #tpu.memory_space<vmem>>, %arg4: memref<8x72xf32, #tpu.memory_space<vmem>>, %arg5: memref<8x1xf32, #tpu.memory_space<vmem>>, %arg6: memref<512x128xf32, #tpu.memory_space<vmem>>, %arg7: memref<1x8x128xf32, #tpu.memory_space<vmem>>) attributes {dimension_semantics = [#tpu.dimension_semantics<parallel>], iteration_bounds = array<i64: 1>, scalar_prefetch = 0 : i64, scratch_operands = 0 : i64, tpu.core_type = #tpu.core_type<tc>, window_params = [{transform_indices = @transform_0, window_bounds = array<i64: 1, 8, 512>}, {pipeline_mode = #tpu.pipeline_mode<synchronous>, transform_indices = @transform_1, window_bounds = array<i64: 8, 72>}, {pipeline_mode = #tpu.pipeline_mode<synchronous>, transform_indices = @transform_2, window_bounds = array<i64: 8, 1>}, {pipeline_mode = #tpu.pipeline_mode<synchronous>, transform_indices = @transform_3, window_bounds = array<i64: 8, 72>}, {pipeline_mode = #tpu.pipeline_mode<synchronous>, transform_indices = @transform_4, window_bounds = array<i64: 8, 1>}, {pipeline_mode = #tpu.pipeline_mode<synchronous>, transform_indices = @transform_5, window_bounds = array<i64: 512, 128>}, {transform_indices = @transform_6, window_bounds = array<i64: 1, 8, 128>}]} {
    %c0 = arith.constant 0 : index
    %c0_0 = arith.constant 0 : index
    %c0_1 = arith.constant 0 : index
    %0 = vector.load %arg1[%c0, %c0_0, %c0_1] : memref<1x8x512xf32, #tpu.memory_space<vmem>>, vector<1x8x512xf32>
    %1 = vector.shape_cast %0 : vector<1x8x512xf32> to vector<8x512xf32>
    %2 = tpu.iota {dimensions = array<i32: 1>} : vector<1x512xi32>
    %c16_i32 = arith.constant 16 : i32
    %c0_i32 = arith.constant 0 : i32
    %3 = arith.cmpi eq, %c16_i32, %c0_i32 : i32
    %c1_i32 = arith.constant 1 : i32
    %4 = arith.select %3, %c1_i32, %c16_i32 : i32
    %5 = vector.broadcast %4 : i32 to vector<1x512xi32>
    %6 = arith.remsi %2, %5 : vector<1x512xi32>
    %c0_i32_2 = arith.constant 0 : i32
    %7 = vector.broadcast %c0_i32_2 : i32 to vector<1x512xi32>
    %8 = arith.cmpi ne, %6, %7 : vector<1x512xi32>
    %c0_i32_3 = arith.constant 0 : i32
    %9 = vector.broadcast %c0_i32_3 : i32 to vector<1x512xi32>
    %10 = arith.cmpi slt, %6, %9 : vector<1x512xi32>
    %c0_i32_4 = arith.constant 0 : i32
    %11 = arith.cmpi slt, %4, %c0_i32_4 : i32
    %12 = vector.broadcast %11 : i1 to vector<1x512xi1>
    %13 = vector.broadcast %12 : vector<1x512xi1> to vector<1x512xi1>
    %14 = arith.xori %10, %13 : vector<1x512xi1>
    %15 = arith.andi %14, %8 : vector<1x512xi1>
    %16 = vector.broadcast %4 : i32 to vector<1x512xi32>
    %17 = arith.addi %6, %16 : vector<1x512xi32>
    %18 = arith.select %15, %17, %6 : vector<1x512xi1>, vector<1x512xi32>
    %c256_i32 = arith.constant 256 : i32
    %c0_i32_5 = arith.constant 0 : i32
    %19 = arith.cmpi eq, %c256_i32, %c0_i32_5 : i32
    %c1_i32_6 = arith.constant 1 : i32
    %20 = arith.select %19, %c1_i32_6, %c256_i32 : i32
    %21 = vector.broadcast %20 : i32 to vector<1x512xi32>
    %22 = arith.remsi %2, %21 : vector<1x512xi32>
    %c0_i32_7 = arith.constant 0 : i32
    %23 = vector.broadcast %c0_i32_7 : i32 to vector<1x512xi32>
    %24 = arith.cmpi ne, %22, %23 : vector<1x512xi32>
    %c0_i32_8 = arith.constant 0 : i32
    %25 = vector.broadcast %c0_i32_8 : i32 to vector<1x512xi32>
    %26 = arith.cmpi slt, %22, %25 : vector<1x512xi32>
    %c0_i32_9 = arith.constant 0 : i32
    %27 = arith.cmpi slt, %20, %c0_i32_9 : i32
    %28 = vector.broadcast %27 : i1 to vector<1x512xi1>
    %29 = vector.broadcast %28 : vector<1x512xi1> to vector<1x512xi1>
    %30 = arith.xori %26, %29 : vector<1x512xi1>
    %31 = arith.andi %30, %24 : vector<1x512xi1>
    %32 = vector.broadcast %20 : i32 to vector<1x512xi32>
    %33 = arith.addi %22, %32 : vector<1x512xi32>
    %34 = arith.select %31, %33, %22 : vector<1x512xi1>, vector<1x512xi32>
    %c0_i32_10 = arith.constant 0 : i32
    %35 = vector.broadcast %c0_i32_10 : i32 to vector<1x512xi32>
    %36 = arith.cmpi eq, %18, %35 : vector<1x512xi32>
    %c15_i32 = arith.constant 15 : i32
    %37 = vector.broadcast %c15_i32 : i32 to vector<1x512xi32>
    %38 = arith.cmpi eq, %18, %37 : vector<1x512xi32>
    %c16_i32_11 = arith.constant 16 : i32
    %39 = vector.broadcast %c16_i32_11 : i32 to vector<1x512xi32>
    %40 = arith.cmpi slt, %34, %39 : vector<1x512xi32>
    %c240_i32 = arith.constant 240 : i32
    %41 = vector.broadcast %c240_i32 : i32 to vector<1x512xi32>
    %42 = arith.cmpi sge, %34, %41 : vector<1x512xi32>
    %c0_12 = arith.constant 0 : index
    %c0_13 = arith.constant 0 : index
    %43 = vector.load %arg2[%c0_12, %c0_13] : memref<8x72xf32, #tpu.memory_space<vmem>>, vector<8x72xf32>
    %c0_14 = arith.constant 0 : index
    %c0_15 = arith.constant 0 : index
    %44 = vector.load %arg3[%c0_14, %c0_15] : memref<8x1xf32, #tpu.memory_space<vmem>>, vector<8x1xf32>
    %45 = vector.shape_cast %36 : vector<1x512xi1> to vector<1x512xi1>
    %46 = vector.broadcast %45 : vector<1x512xi1> to vector<8x512xi1>
    %47 = vector.shape_cast %38 : vector<1x512xi1> to vector<1x512xi1>
    %48 = vector.broadcast %47 : vector<1x512xi1> to vector<8x512xi1>
    %49 = vector.shape_cast %40 : vector<1x512xi1> to vector<1x512xi1>
    %50 = vector.broadcast %49 : vector<1x512xi1> to vector<8x512xi1>
    %51 = vector.shape_cast %42 : vector<1x512xi1> to vector<1x512xi1>
    %52 = vector.broadcast %51 : vector<1x512xi1> to vector<8x512xi1>
    %c1_i32_16 = arith.constant 1 : i32
    %53 = tpu.dynamic_rotate %1 by %c1_i32_16 dim 1 : vector<8x512xf32>, i32 -> vector<8x512xf32>
    %54 = arith.select %46, %1, %53 : vector<8x512xi1>, vector<8x512xf32>
    %c16_i32_17 = arith.constant 16 : i32
    %55 = tpu.dynamic_rotate %54 by %c16_i32_17 dim 1 : vector<8x512xf32>, i32 -> vector<8x512xf32>
    %56 = arith.select %50, %54, %55 : vector<8x512xi1>, vector<8x512xf32>
    %c16_i32_18 = arith.constant 16 : i32
    %57 = tpu.dynamic_rotate %1 by %c16_i32_18 dim 1 : vector<8x512xf32>, i32 -> vector<8x512xf32>
    %58 = arith.select %50, %1, %57 : vector<8x512xi1>, vector<8x512xf32>
    %c511_i32 = arith.constant 511 : i32
    %59 = tpu.dynamic_rotate %1 by %c511_i32 dim 1 : vector<8x512xf32>, i32 -> vector<8x512xf32>
    %60 = arith.select %48, %1, %59 : vector<8x512xi1>, vector<8x512xf32>
    %c16_i32_19 = arith.constant 16 : i32
    %61 = tpu.dynamic_rotate %60 by %c16_i32_19 dim 1 : vector<8x512xf32>, i32 -> vector<8x512xf32>
    %62 = arith.select %50, %60, %61 : vector<8x512xi1>, vector<8x512xf32>
    %c1_i32_20 = arith.constant 1 : i32
    %63 = tpu.dynamic_rotate %1 by %c1_i32_20 dim 1 : vector<8x512xf32>, i32 -> vector<8x512xf32>
    %64 = arith.select %46, %1, %63 : vector<8x512xi1>, vector<8x512xf32>
    %c511_i32_21 = arith.constant 511 : i32
    %65 = tpu.dynamic_rotate %1 by %c511_i32_21 dim 1 : vector<8x512xf32>, i32 -> vector<8x512xf32>
    %66 = arith.select %48, %1, %65 : vector<8x512xi1>, vector<8x512xf32>
    %c1_i32_22 = arith.constant 1 : i32
    %67 = tpu.dynamic_rotate %1 by %c1_i32_22 dim 1 : vector<8x512xf32>, i32 -> vector<8x512xf32>
    %68 = arith.select %46, %1, %67 : vector<8x512xi1>, vector<8x512xf32>
    %c496_i32 = arith.constant 496 : i32
    %69 = tpu.dynamic_rotate %68 by %c496_i32 dim 1 : vector<8x512xf32>, i32 -> vector<8x512xf32>
    %70 = arith.select %52, %68, %69 : vector<8x512xi1>, vector<8x512xf32>
    %c496_i32_23 = arith.constant 496 : i32
    %71 = tpu.dynamic_rotate %1 by %c496_i32_23 dim 1 : vector<8x512xf32>, i32 -> vector<8x512xf32>
    %72 = arith.select %52, %1, %71 : vector<8x512xi1>, vector<8x512xf32>
    %c511_i32_24 = arith.constant 511 : i32
    %73 = tpu.dynamic_rotate %1 by %c511_i32_24 dim 1 : vector<8x512xf32>, i32 -> vector<8x512xf32>
    %74 = arith.select %48, %1, %73 : vector<8x512xi1>, vector<8x512xf32>
    %c496_i32_25 = arith.constant 496 : i32
    %75 = tpu.dynamic_rotate %74 by %c496_i32_25 dim 1 : vector<8x512xf32>, i32 -> vector<8x512xf32>
    %76 = arith.select %52, %74, %75 : vector<8x512xi1>, vector<8x512xf32>
    %77 = tpu.concatenate %56, %58, %62, %64, %1, %66, %70, %72, %76 in 0 : vector<8x512xf32>, vector<8x512xf32>, vector<8x512xf32>, vector<8x512xf32>, vector<8x512xf32>, vector<8x512xf32>, vector<8x512xf32>, vector<8x512xf32>, vector<8x512xf32> -> vector<72x512xf32>
    %cst = arith.constant dense<0.000000e+00> : vector<8x512xf32>
    %78 = tpu.matmul %43, %77, %cst {dimension_numbers = #tpu.dot_dimension_numbers<[1], [0], [0], [1], [0, 0, 1, 1], [], []>} : vector<8x72xf32>, vector<72x512xf32>, vector<8x512xf32> -> vector<8x512xf32>
    %79 = vector.broadcast %44 : vector<8x1xf32> to vector<8x512xf32>
    %80 = arith.addf %78, %79 : vector<8x512xf32>
    %cst_26 = arith.constant 0.000000e+00 : f32
    %81 = vector.broadcast %cst_26 : f32 to vector<8x512xf32>
    %82 = arith.cmpf oge, %80, %81 : vector<8x512xf32>
    %cst_27 = arith.constant 1.000000e-01 : f32
    %83 = vector.broadcast %cst_27 : f32 to vector<8x512xf32>
    %84 = arith.mulf %83, %80 : vector<8x512xf32>
    %85 = arith.select %82, %80, %84 : vector<8x512xi1>, vector<8x512xf32>
    %c0_28 = arith.constant 0 : index
    %c0_29 = arith.constant 0 : index
    %86 = vector.load %arg4[%c0_28, %c0_29] : memref<8x72xf32, #tpu.memory_space<vmem>>, vector<8x72xf32>
    %c0_30 = arith.constant 0 : index
    %c0_31 = arith.constant 0 : index
    %87 = vector.load %arg5[%c0_30, %c0_31] : memref<8x1xf32, #tpu.memory_space<vmem>>, vector<8x1xf32>
    %c1_i32_32 = arith.constant 1 : i32
    %88 = tpu.dynamic_rotate %85 by %c1_i32_32 dim 1 : vector<8x512xf32>, i32 -> vector<8x512xf32>
    %89 = arith.select %46, %85, %88 : vector<8x512xi1>, vector<8x512xf32>
    %c16_i32_33 = arith.constant 16 : i32
    %90 = tpu.dynamic_rotate %89 by %c16_i32_33 dim 1 : vector<8x512xf32>, i32 -> vector<8x512xf32>
    %91 = arith.select %50, %89, %90 : vector<8x512xi1>, vector<8x512xf32>
    %c16_i32_34 = arith.constant 16 : i32
    %92 = tpu.dynamic_rotate %85 by %c16_i32_34 dim 1 : vector<8x512xf32>, i32 -> vector<8x512xf32>
    %93 = arith.select %50, %85, %92 : vector<8x512xi1>, vector<8x512xf32>
    %c511_i32_35 = arith.constant 511 : i32
    %94 = tpu.dynamic_rotate %85 by %c511_i32_35 dim 1 : vector<8x512xf32>, i32 -> vector<8x512xf32>
    %95 = arith.select %48, %85, %94 : vector<8x512xi1>, vector<8x512xf32>
    %c16_i32_36 = arith.constant 16 : i32
    %96 = tpu.dynamic_rotate %95 by %c16_i32_36 dim 1 : vector<8x512xf32>, i32 -> vector<8x512xf32>
    %97 = arith.select %50, %95, %96 : vector<8x512xi1>, vector<8x512xf32>
    %c1_i32_37 = arith.constant 1 : i32
    %98 = tpu.dynamic_rotate %85 by %c1_i32_37 dim 1 : vector<8x512xf32>, i32 -> vector<8x512xf32>
    %99 = arith.select %46, %85, %98 : vector<8x512xi1>, vector<8x512xf32>
    %c511_i32_38 = arith.constant 511 : i32
    %100 = tpu.dynamic_rotate %85 by %c511_i32_38 dim 1 : vector<8x512xf32>, i32 -> vector<8x512xf32>
    %101 = arith.select %48, %85, %100 : vector<8x512xi1>, vector<8x512xf32>
    %c1_i32_39 = arith.constant 1 : i32
    %102 = tpu.dynamic_rotate %85 by %c1_i32_39 dim 1 : vector<8x512xf32>, i32 -> vector<8x512xf32>
    %103 = arith.select %46, %85, %102 : vector<8x512xi1>, vector<8x512xf32>
    %c496_i32_40 = arith.constant 496 : i32
    %104 = tpu.dynamic_rotate %103 by %c496_i32_40 dim 1 : vector<8x512xf32>, i32 -> vector<8x512xf32>
    %105 = arith.select %52, %103, %104 : vector<8x512xi1>, vector<8x512xf32>
    %c496_i32_41 = arith.constant 496 : i32
    %106 = tpu.dynamic_rotate %85 by %c496_i32_41 dim 1 : vector<8x512xf32>, i32 -> vector<8x512xf32>
    %107 = arith.select %52, %85, %106 : vector<8x512xi1>, vector<8x512xf32>
    %c511_i32_42 = arith.constant 511 : i32
    %108 = tpu.dynamic_rotate %85 by %c511_i32_42 dim 1 : vector<8x512xf32>, i32 -> vector<8x512xf32>
    %109 = arith.select %48, %85, %108 : vector<8x512xi1>, vector<8x512xf32>
    %c496_i32_43 = arith.constant 496 : i32
    %110 = tpu.dynamic_rotate %109 by %c496_i32_43 dim 1 : vector<8x512xf32>, i32 -> vector<8x512xf32>
    %111 = arith.select %52, %109, %110 : vector<8x512xi1>, vector<8x512xf32>
    %112 = tpu.concatenate %91, %93, %97, %99, %85, %101, %105, %107, %111 in 0 : vector<8x512xf32>, vector<8x512xf32>, vector<8x512xf32>, vector<8x512xf32>, vector<8x512xf32>, vector<8x512xf32>, vector<8x512xf32>, vector<8x512xf32>, vector<8x512xf32> -> vector<72x512xf32>
    %cst_44 = arith.constant dense<0.000000e+00> : vector<8x512xf32>
    %113 = tpu.matmul %86, %112, %cst_44 {dimension_numbers = #tpu.dot_dimension_numbers<[1], [0], [0], [1], [0, 0, 1, 1], [], []>} : vector<8x72xf32>, vector<72x512xf32>, vector<8x512xf32> -> vector<8x512xf32>
    %114 = vector.broadcast %87 : vector<8x1xf32> to vector<8x512xf32>
    %115 = arith.addf %113, %114 : vector<8x512xf32>
    %cst_45 = arith.constant 0.000000e+00 : f32
    %116 = vector.broadcast %cst_45 : f32 to vector<8x512xf32>
    %117 = arith.cmpf oge, %115, %116 : vector<8x512xf32>
    %cst_46 = arith.constant 1.000000e-01 : f32
    %118 = vector.broadcast %cst_46 : f32 to vector<8x512xf32>
    %119 = arith.mulf %118, %115 : vector<8x512xf32>
    %120 = arith.select %117, %115, %119 : vector<8x512xi1>, vector<8x512xf32>
    %c511_i32_47 = arith.constant 511 : i32
    %121 = tpu.dynamic_rotate %120 by %c511_i32_47 dim 1 : vector<8x512xf32>, i32 -> vector<8x512xf32>
    %122 = arith.maximumf %120, %121 : vector<8x512xf32>
    %c496_i32_48 = arith.constant 496 : i32
    %123 = tpu.dynamic_rotate %122 by %c496_i32_48 dim 1 : vector<8x512xf32>, i32 -> vector<8x512xf32>
    %124 = arith.maximumf %122, %123 : vector<8x512xf32>
    %c0_49 = arith.constant 0 : index
    %c0_50 = arith.constant 0 : index
    %125 = vector.load %arg6[%c0_49, %c0_50] : memref<512x128xf32, #tpu.memory_space<vmem>>, vector<512x128xf32>
    %cst_51 = arith.constant dense<0.000000e+00> : vector<8x128xf32>
    %126 = tpu.matmul %124, %125, %cst_51 {dimension_numbers = #tpu.dot_dimension_numbers<[1], [0], [0], [1], [0, 0, 1, 1], [], []>} : vector<8x512xf32>, vector<512x128xf32>, vector<8x128xf32> -> vector<8x128xf32>
    %c0_52 = arith.constant 0 : index
    %c0_53 = arith.constant 0 : index
    %c0_54 = arith.constant 0 : index
    %127 = vector.load %arg7[%c0_52, %c0_53, %c0_54] : memref<1x8x128xf32, #tpu.memory_space<vmem>>, vector<1x8x128xf32>
    %128 = vector.shape_cast %127 : vector<1x8x128xf32> to vector<8x128xf32>
    %129 = vector.shape_cast %126 : vector<8x128xf32> to vector<1x8x128xf32>
    tpu.vector_store %arg7[%c0_52, %c0_53, %c0_54], %129 {strides = array<i32>} : memref<1x8x128xf32, #tpu.memory_space<vmem>>, vector<1x8x128xf32>,
    return
  }
  func.func @transform_0(%arg0: i32) -> (i32, i32, i32) {
    %c0_i32 = arith.constant 0 : i32
    %c0_i32_0 = arith.constant 0 : i32
    %c0_i32_1 = arith.constant 0 : i32
    return %arg0, %c0_i32, %c0_i32_0 : i32, i32, i32
  }
  func.func @transform_1(%arg0: i32) -> (i32, i32) {
    %c0_i32 = arith.constant 0 : i32
    %c0_i32_0 = arith.constant 0 : i32
    %c0_i32_1 = arith.constant 0 : i32
    return %c0_i32, %c0_i32_0 : i32, i32
  }
  func.func @transform_2(%arg0: i32) -> (i32, i32) {
    %c0_i32 = arith.constant 0 : i32
    %c0_i32_0 = arith.constant 0 : i32
    %c0_i32_1 = arith.constant 0 : i32
    return %c0_i32, %c0_i32_0 : i32, i32
  }
  func.func @transform_3(%arg0: i32) -> (i32, i32) {
    %c0_i32 = arith.constant 0 : i32
    %c0_i32_0 = arith.constant 0 : i32
    %c0_i32_1 = arith.constant 0 : i32
    return %c0_i32, %c0_i32_0 : i32, i32
  }
  func.func @transform_4(%arg0: i32) -> (i32, i32) {
    %c0_i32 = arith.constant 0 : i32
    %c0_i32_0 = arith.constant 0 : i32
    %c0_i32_1 = arith.constant 0 : i32
    return %c0_i32, %c0_i32_0 : i32, i32
  }
  func.func @transform_5(%arg0: i32) -> (i32, i32) {
    %c0_i32 = arith.constant 0 : i32
    %c0_i32_0 = arith.constant 0 : i32
    %c0_i32_1 = arith.constant 0 : i32
    return %c0_i32, %c0_i32_0 : i32, i32
  }
  func.func @transform_6(%arg0: i32) -> (i32, i32, i32) {
    %c0_i32 = arith.constant 0 : i32
    %c0_i32_0 = arith.constant 0 : i32
    %c0_i32_1 = arith.constant 0 : i32
    return %arg0, %c0_i32, %c0_i32_0 : i32, i32, i32
  }
}

</mosaic_0001>

<llo_original>
// kernel: tpu_custom_call.1
$region0: #{tpu_custom_call.1}
  #allocation0 [shape = 'u32[]', space=smem, size = 0x4, offset = 0x4, fixed_abs, tag = 'smem constant byte address 0x4 - core index']
  #allocation1 [shape = 'u32[72,128]{1,0:T(1,128)}', space=vmem, size = 0x9000, scoped, tag = 'internal scratch']
  %s0 = inlined_call_operand.hbm [shape: f32[1,8,512], index: 0, kind: input, shape index: {}]
  %s1 = inlined_call_operand.vmem [shape: f32[8,72], index: 1, kind: input, shape index: {}]
  %s2 = inlined_call_operand.vmem [shape: f32[8,1], index: 2, kind: input, shape index: {}]
  %s3 = inlined_call_operand.vmem [shape: f32[8,72], index: 3, kind: input, shape index: {}]
  %s4 = inlined_call_operand.vmem [shape: f32[8,1], index: 4, kind: input, shape index: {}]
  %s5 = inlined_call_operand.hbm [shape: f32[512,128], index: 5, kind: input, shape index: {}]
  %s6 = inlined_call_operand.hbm [shape: f32[1,8,128], index: 6, kind: output, shape index: {}]
  %s7 = sld [smem:[#allocation0]]
  $region42: #{tpu_custom_call.1} parent=0
    _
  %s9 = ssub.s32 1, %s7
  %s10 = scalar_select 0, %s9, %s7
  $region1: #{tpu_custom_call.1} parent=0
    #allocation2 [shape = 'u8[16384]{0}', space=vmem, size = 0x4000, scoped, tag = 'input window, operand 0, single buffered']
    #allocation3 [shape = 's32[1]{0}', space=sflag, size = 0x4, scoped, tag = 'scoped memory for tpu_custom_call.1']
    #allocation4 [shape = 's32[1]{0}', space=sflag, size = 0x4, scoped, tag = 'scoped memory for tpu_custom_call.1']
    #allocation5 [shape = 'u8[262144]{0}', space=vmem, size = 0x40000, scoped, tag = 'input window, operand 5, single buffered']
    #allocation6 [shape = 's32[1]{0}', space=sflag, size = 0x4, scoped, tag = 'scoped memory for tpu_custom_call.1']
    #allocation7 [shape = 'u8[4096]{0}', space=vmem, size = 0x1000, scoped, tag = 'output window, operand 0, single buffered']
    %11 = vsyncpa [#allocation3], 0
    %12 = vsyncpa [#allocation6], 0
    %13 = vsyncpa [#allocation4], 0
    // Predicated region
    $region2: #{tpu_custom_call.1} parent=1 // pred_check
      _
    $region3: #{tpu_custom_call.1} parent=1 // pred_check_branch
      %15 = sbr.rel (0) target = $region5
    $region4: #{tpu_custom_call.1} parent=1 // pred_region
      %17 = vsyncadd [#allocation3], 0
      %s19 = sshll.u32 %s0, 4
      %s20 = int_to_ptr.hbm [resolvable:$true] %s19
      %s21 = sshll.u32 [#allocation2], 4
      %s22 = int_to_ptr.vmem [resolvable:$true] %s21
      %24 = dma.hbm_to_vmem [thread:$0]  %s20, 512, %s22, [#allocation3]
    $region5: #{tpu_custom_call.1} parent=1 // pred_fallthru
      _
    // Predicated region
    $region6: #{tpu_custom_call.1} parent=1 // pred_check
      _
    $region7: #{tpu_custom_call.1} parent=1 // pred_check_branch
      %26 = sbr.rel (0) target = $region9
    $region8: #{tpu_custom_call.1} parent=1 // pred_region
      _
    $region9: #{tpu_custom_call.1} parent=1 // pred_fallthru
      _
    // Predicated region
    $region10: #{tpu_custom_call.1} parent=1 // pred_check
      _
    $region11: #{tpu_custom_call.1} parent=1 // pred_check_branch
      %28 = sbr.rel (0) target = $region13
    $region12: #{tpu_custom_call.1} parent=1 // pred_region
      _
    $region13: #{tpu_custom_call.1} parent=1 // pred_fallthru
      _
    // Predicated region
    $region14: #{tpu_custom_call.1} parent=1 // pred_check
      _
    $region15: #{tpu_custom_call.1} parent=1 // pred_check_branch
      %30 = sbr.rel (0) target = $region17
    $region16: #{tpu_custom_call.1} parent=1 // pred_region
      _
    $region17: #{tpu_custom_call.1} parent=1 // pred_fallthru
      _
    // Predicated region
    $region18: #{tpu_custom_call.1} parent=1 // pred_check
      _
    $region19: #{tpu_custom_call.1} parent=1 // pred_check_branch
      %32 = sbr.rel (0) target = $region21
    $region20: #{tpu_custom_call.1} parent=1 // pred_region
      _
    $region21: #{tpu_custom_call.1} parent=1 // pred_fallthru
      _
    // Predicated region
    $region22: #{tpu_custom_call.1} parent=1 // pred_check
      _
    $region23: #{tpu_custom_call.1} parent=1 // pred_check_branch
      %34 = sbr.rel (0) target = $region25
    $region24: #{tpu_custom_call.1} parent=1 // pred_region
      %36 = vsyncadd [#allocation6], 0
      %s37 = sshll.u32 %s5, 4
      %s38 = int_to_ptr.hbm [resolvable:$true] %s37
      %s39 = sshll.u32 [#allocation5], 4
      %s40 = int_to_ptr.vmem [resolvable:$true] %s39
      %45 = dma.hbm_to_vmem [thread:$0]  %s38, 8192, %s40, [#allocation6], 128, 128, 8
    $region25: #{tpu_custom_call.1} parent=1 // pred_fallthru
      _
    // Predicated region
    $region26: #{tpu_custom_call.1} parent=1 // pred_check
      _
    $region27: #{tpu_custom_call.1} parent=1 // pred_check_branch
      %47 = sbr.rel (0) target = $region29
    $region28: #{tpu_custom_call.1} parent=1 // pred_region
      %49 = dma.done [#allocation3], 512
    $region29: #{tpu_custom_call.1} parent=1 // pred_fallthru
      _
    // Predicated region
    $region30: #{tpu_custom_call.1} parent=1 // pred_check
      _
    $region31: #{tpu_custom_call.1} parent=1 // pred_check_branch
      %51 = sbr.rel (0) target = $region33
    $region32: #{tpu_custom_call.1} parent=1 // pred_region
      %53 = dma.done [#allocation6], 8192
    $region33: #{tpu_custom_call.1} parent=1 // pred_fallthru
      _
    %v54 = vld [vmem:[#allocation2] sm:$0xff]
    %v55 = vld [vmem:[#allocation2 + $0x8] sm:$0xff]
    %v56 = vld [vmem:[#allocation2 + $0x10] sm:$0xff]
    %v57 = vld [vmem:[#allocation2 + $0x18] sm:$0xff]
    %v58 = vlaneseq
    %v59 = vand.u32 %v58, 127
    %v60 = vadd.s32 %v59, 128
    %v61 = vadd.s32 %v59, 256
    %v62 = vadd.s32 %v59, 384
    %vm63 = vcmp.lt.s32.totalorder %v59, 0
    %v64 = vsub.s32 0, %v59
    %v65 = vsel %vm63, %v64, %v59
    %v66 = vshrl.u32 %v65, 4
    %v67 = vand.u32 %v65, 15
    %v68 = vsub.s32 0, %v67
    %v69 = vsel %vm63, %v68, %v67
    %vm70 = vcmp.lt.s32.totalorder %v60, 0
    %v71 = vsub.s32 0, %v60
    %v72 = vsel %vm70, %v71, %v60
    %v73 = vshrl.u32 %v72, 4
    %v74 = vand.u32 %v72, 15
    %v75 = vsub.s32 0, %v74
    %v76 = vsel %vm70, %v75, %v74
    %vm77 = vcmp.lt.s32.totalorder %v61, 0
    %v78 = vsub.s32 0, %v61
    %v79 = vsel %vm77, %v78, %v61
    %v80 = vshrl.u32 %v79, 4
    %v81 = vand.u32 %v79, 15
    %v82 = vsub.s32 0, %v81
    %v83 = vsel %vm77, %v82, %v81
    %vm84 = vcmp.lt.s32.totalorder %v62, 0
    %v85 = vsub.s32 0, %v62
    %v86 = vsel %vm84, %v85, %v62
    %v87 = vshrl.u32 %v86, 4
    %v88 = vand.u32 %v86, 15
    %v89 = vsub.s32 0, %v88
    %v90 = vsel %vm84, %v89, %v88
    %vm91 = vcmp.ne.s32.totalorder %v69, 0
    %vm92 = vcmp.ne.s32.totalorder %v76, 0
    %vm93 = vcmp.ne.s32.totalorder %v83, 0
    %vm94 = vcmp.ne.s32.totalorder %v90, 0
    %vm95 = vcmp.lt.s32.totalorder %v69, 0
    %vm96 = vcmp.lt.s32.totalorder %v76, 0
    %vm97 = vcmp.lt.s32.totalorder %v83, 0
    %vm98 = vcmp.lt.s32.totalorder %v90, 0
    %vm99 = vmand %vm95, %vm91
    %vm100 = vmand %vm96, %vm92
    %vm101 = vmand %vm97, %vm93
    %vm102 = vmand %vm98, %vm94
    %v103 = vadd.s32 %v69, 16
    %v104 = vadd.s32 %v76, 16
    %v105 = vadd.s32 %v83, 16
    %v106 = vadd.s32 %v90, 16
    %v107 = vsel %vm99, %v103, %v69
    %v108 = vsel %vm100, %v104, %v76
    %v109 = vsel %vm101, %v105, %v83
    %v110 = vsel %vm102, %v106, %v90
    %vm111 = vcmp.lt.s32.totalorder %v59, 0
    %v112 = vsub.s32 0, %v59
    %v113 = vsel %vm111, %v112, %v59
    %v114 = vshrl.u32 %v113, 8
    %v115 = vand.u32 %v113, 255
    %v116 = vsub.s32 0, %v115
    %v117 = vsel %vm111, %v116, %v115
    %vm118 = vcmp.lt.s32.totalorder %v60, 0
    %v119 = vsub.s32 0, %v60
    %v120 = vsel %vm118, %v119, %v60
    %v121 = vshrl.u32 %v120, 8
    %v122 = vand.u32 %v120, 255
    %v123 = vsub.s32 0, %v122
    %v124 = vsel %vm118, %v123, %v122
    %vm125 = vcmp.lt.s32.totalorder %v61, 0
    %v126 = vsub.s32 0, %v61
    %v127 = vsel %vm125, %v126, %v61
    %v128 = vshrl.u32 %v127, 8
    %v129 = vand.u32 %v127, 255
    %v130 = vsub.s32 0, %v129
    %v131 = vsel %vm125, %v130, %v129
    %vm132 = vcmp.lt.s32.totalorder %v62, 0
    %v133 = vsub.s32 0, %v62
    %v134 = vsel %vm132, %v133, %v62
    %v135 = vshrl.u32 %v134, 8
    %v136 = vand.u32 %v134, 255
    %v137 = vsub.s32 0, %v136
    %v138 = vsel %vm132, %v137, %v136
    %vm139 = vcmp.ne.s32.totalorder %v117, 0
    %vm140 = vcmp.ne.s32.totalorder %v124, 0
    %vm141 = vcmp.ne.s32.totalorder %v131, 0
    %vm142 = vcmp.ne.s32.totalorder %v138, 0
    %vm143 = vcmp.lt.s32.totalorder %v117, 0
    %vm144 = vcmp.lt.s32.totalorder %v124, 0
    %vm145 = vcmp.lt.s32.totalorder %v131, 0
    %vm146 = vcmp.lt.s32.totalorder %v138, 0
    %vm147 = vmand %vm143, %vm139
    %vm148 = vmand %vm144, %vm140
    %vm149 = vmand %vm145, %vm141
    %vm150 = vmand %vm146, %vm142
    %v151 = vadd.s32 %v117, 256
    %v152 = vadd.s32 %v124, 256
    %v153 = vadd.s32 %v131, 256
    %v154 = vadd.s32 %v138, 256
    %v155 = vsel %vm147, %v151, %v117
    %v156 = vsel %vm148, %v152, %v124
    %v157 = vsel %vm149, %v153, %v131
    %v158 = vsel %vm150, %v154, %v138
    %vm159 = vcmp.eq.s32.totalorder %v107, 0
    %vm160 = vcmp.eq.s32.totalorder %v108, 0
    %vm161 = vcmp.eq.s32.totalorder %v109, 0
    %vm162 = vcmp.eq.s32.totalorder %v110, 0
    %vm163 = vcmp.eq.s32.totalorder %v107, 15
    %vm164 = vcmp.eq.s32.totalorder %v108, 15
    %vm165 = vcmp.eq.s32.totalorder %v109, 15
    %vm166 = vcmp.eq.s32.totalorder %v110, 15
    %vm167 = vcmp.lt.s32.totalorder %v155, 16
    %vm168 = vcmp.lt.s32.totalorder %v156, 16
    %vm169 = vcmp.lt.s32.totalorder %v157, 16
    %vm170 = vcmp.lt.s32.totalorder %v158, 16
    %vm171 = vcmp.ge.s32.totalorder %v155, 240
    %vm172 = vcmp.ge.s32.totalorder %v156, 240
    %vm173 = vcmp.ge.s32.totalorder %v157, 240
    %vm174 = vcmp.ge.s32.totalorder %v158, 240
    %v175 = vld [vmem:[%s1] sm:$0xff]
    %v176 = vld [vmem:[%s2] sm:$0xff]
    %v177 = vsel %vm159, 1, 0
    %v178 = vsel %vm160, 1, 0
    %v179 = vsel %vm161, 1, 0
    %v180 = vsel %vm162, 1, 0
    %vm181 = vcmp.eq.s32.totalorder %v177, 1
    %vm182 = vcmp.eq.s32.totalorder %v178, 1
    %vm183 = vcmp.eq.s32.totalorder %v179, 1
    %vm184 = vcmp.eq.s32.totalorder %v180, 1
    %v185 = vsel %vm163, 1, 0
    %v186 = vsel %vm164, 1, 0
    %v187 = vsel %vm165, 1, 0
    %v188 = vsel %vm166, 1, 0
    %vm189 = vcmp.eq.s32.totalorder %v185, 1
    %vm190 = vcmp.eq.s32.totalorder %v186, 1
    %vm191 = vcmp.eq.s32.totalorder %v187, 1
    %vm192 = vcmp.eq.s32.totalorder %v188, 1
    %v193 = vsel %vm167, 1, 0
    %v194 = vsel %vm168, 1, 0
    %v195 = vsel %vm169, 1, 0
    %v196 = vsel %vm170, 1, 0
    %vm197 = vcmp.eq.s32.totalorder %v193, 1
    %vm198 = vcmp.eq.s32.totalorder %v194, 1
    %vm199 = vcmp.eq.s32.totalorder %v195, 1
    %vm200 = vcmp.eq.s32.totalorder %v196, 1
    %v201 = vsel %vm171, 1, 0
    %v202 = vsel %vm172, 1, 0
    %v203 = vsel %vm173, 1, 0
    %v204 = vsel %vm174, 1, 0
    %vm205 = vcmp.eq.s32.totalorder %v201, 1
    %vm206 = vcmp.eq.s32.totalorder %v202, 1
    %vm207 = vcmp.eq.s32.totalorder %v203, 1
    %vm208 = vcmp.eq.s32.totalorder %v204, 1
    %209 = vrot.lane.b32.xlu0 %v54, 1
    %v210 = vpop.permute.xlu0 %209
    %211 = vrot.lane.b32.xlu0 %v55, 1
    %v212 = vpop.permute.xlu0 %211
    %213 = vrot.lane.b32.xlu0 %v56, 1
    %v214 = vpop.permute.xlu0 %213
    %215 = vrot.lane.b32.xlu0 %v57, 1
    %v216 = vpop.permute.xlu0 %215
    %vm217 = vcmp.lt.s32.totalorder %v59, 1
    %v218 = vsel %vm217, %v214, %v216
    %v219 = vsel %vm217, %v212, %v214
    %v220 = vsel %vm217, %v210, %v212
    %v221 = vsel %vm217, %v216, %v210
    %v222 = vsel %vm181, %v54, %v221
    %v223 = vsel %vm182, %v55, %v220
    %v224 = vsel %vm183, %v56, %v219
    %v225 = vsel %vm184, %v57, %v218
    %226 = vrot.lane.b32.xlu0 %v222, 16
    %v227 = vpop.permute.xlu0 %226
    %228 = vrot.lane.b32.xlu0 %v223, 16
    %v229 = vpop.permute.xlu0 %228
    %230 = vrot.lane.b32.xlu0 %v224, 16
    %v231 = vpop.permute.xlu0 %230
    %232 = vrot.lane.b32.xlu0 %v225, 16
    %v233 = vpop.permute.xlu0 %232
    %vm234 = vcmp.lt.s32.totalorder %v59, 16
    %v235 = vsel %vm234, %v231, %v233
    %v236 = vsel %vm234, %v229, %v231
    %v237 = vsel %vm234, %v227, %v229
    %v238 = vsel %vm234, %v233, %v227
    %v239 = vsel %vm197, %v222, %v238
    %v240 = vsel %vm198, %v223, %v237
    %v241 = vsel %vm199, %v224, %v236
    %v242 = vsel %vm200, %v225, %v235
    %243 = vrot.lane.b32.xlu0 %v54, 16
    %v244 = vpop.permute.xlu0 %243
    %245 = vrot.lane.b32.xlu0 %v55, 16
    %v246 = vpop.permute.xlu0 %245
    %247 = vrot.lane.b32.xlu0 %v56, 16
    %v248 = vpop.permute.xlu0 %247
    %249 = vrot.lane.b32.xlu0 %v57, 16
    %v250 = vpop.permute.xlu0 %249
    %v251 = vsel %vm234, %v248, %v250
    %v252 = vsel %vm234, %v246, %v248
    %v253 = vsel %vm234, %v244, %v246
    %v254 = vsel %vm234, %v250, %v244
    %v255 = vsel %vm197, %v54, %v254
    %v256 = vsel %vm198, %v55, %v253
    %v257 = vsel %vm199, %v56, %v252
    %v258 = vsel %vm200, %v57, %v251
    %259 = vrot.lane.b32.xlu0 %v54, 127
    %v260 = vpop.permute.xlu0 %259
    %261 = vrot.lane.b32.xlu0 %v55, 127
    %v262 = vpop.permute.xlu0 %261
    %263 = vrot.lane.b32.xlu0 %v56, 127
    %v264 = vpop.permute.xlu0 %263
    %265 = vrot.lane.b32.xlu0 %v57, 127
    %v266 = vpop.permute.xlu0 %265
    %vm267 = vcmp.lt.s32.totalorder %v59, 127
    %v268 = vsel %vm267, %v264, %v266
    %v269 = vsel %vm267, %v262, %v264
    %v270 = vsel %vm267, %v260, %v262
    %v271 = vsel %vm267, %v266, %v260
    %v272 = vsel %vm189, %v54, %v270
    %v273 = vsel %vm190, %v55, %v269
    %v274 = vsel %vm191, %v56, %v268
    %v275 = vsel %vm192, %v57, %v271
    %276 = vrot.lane.b32.xlu0 %v272, 16
    %v277 = vpop.permute.xlu0 %276
    %278 = vrot.lane.b32.xlu0 %v273, 16
    %v279 = vpop.permute.xlu0 %278
    %280 = vrot.lane.b32.xlu0 %v274, 16
    %v281 = vpop.permute.xlu0 %280
    %282 = vrot.lane.b32.xlu0 %v275, 16
    %v283 = vpop.permute.xlu0 %282
    %v284 = vsel %vm234, %v281, %v283
    %v285 = vsel %vm234, %v279, %v281
    %v286 = vsel %vm234, %v277, %v279
    %v287 = vsel %vm234, %v283, %v277
    %v288 = vsel %vm197, %v272, %v287
    %v289 = vsel %vm198, %v273, %v286
    %v290 = vsel %vm199, %v274, %v285
    %v291 = vsel %vm200, %v275, %v284
    %292 = vrot.lane.b32.xlu0 %v222, 112
    %v293 = vpop.permute.xlu0 %292
    %294 = vrot.lane.b32.xlu0 %v223, 112
    %v295 = vpop.permute.xlu0 %294
    %296 = vrot.lane.b32.xlu0 %v224, 112
    %v297 = vpop.permute.xlu0 %296
    %298 = vrot.lane.b32.xlu0 %v225, 112
    %v299 = vpop.permute.xlu0 %298
    %vm300 = vcmp.lt.s32.totalorder %v59, 112
    %v301 = vsel %vm300, %v297, %v299
    %v302 = vsel %vm300, %v295, %v297
    %v303 = vsel %vm300, %v293, %v295
    %v304 = vsel %vm300, %v299, %v293
    %v305 = vsel %vm205, %v222, %v303
    %v306 = vsel %vm206, %v223, %v302
    %v307 = vsel %vm207, %v224, %v301
    %v308 = vsel %vm208, %v225, %v304
    %309 = vrot.lane.b32.xlu0 %v54, 112
    %v310 = vpop.permute.xlu0 %309
    %311 = vrot.lane.b32.xlu0 %v55, 112
    %v312 = vpop.permute.xlu0 %311
    %313 = vrot.lane.b32.xlu0 %v56, 112
    %v314 = vpop.permute.xlu0 %313
    %315 = vrot.lane.b32.xlu0 %v57, 112
    %v316 = vpop.permute.xlu0 %315
    %v317 = vsel %vm300, %v314, %v316
    %v318 = vsel %vm300, %v312, %v314
    %v319 = vsel %vm300, %v310, %v312
    %v320 = vsel %vm300, %v316, %v310
    %v321 = vsel %vm205, %v54, %v319
    %v322 = vsel %vm206, %v55, %v318
    %v323 = vsel %vm207, %v56, %v317
    %v324 = vsel %vm208, %v57, %v320
    %325 = vrot.lane.b32.xlu0 %v272, 112
    %v326 = vpop.permute.xlu0 %325
    %327 = vrot.lane.b32.xlu0 %v273, 112
    %v328 = vpop.permute.xlu0 %327
    %329 = vrot.lane.b32.xlu0 %v274, 112
    %v330 = vpop.permute.xlu0 %329
    %331 = vrot.lane.b32.xlu0 %v275, 112
    %v332 = vpop.permute.xlu0 %331
    %v333 = vsel %vm300, %v330, %v332
    %v334 = vsel %vm300, %v328, %v330
    %v335 = vsel %vm300, %v326, %v328
    %v336 = vsel %vm300, %v332, %v326
    %v337 = vsel %vm205, %v272, %v335
    %v338 = vsel %vm206, %v273, %v334
    %v339 = vsel %vm207, %v274, %v333
    %v340 = vsel %vm208, %v275, %v336
    %342 = vset.pattern.permute.xlu0 0
    %343 = vperm.xlu0 %342, %v176
    %v344 = vpop.permute.xlu0 %343
    %vm346 = vcmask 588800
    %v348 = vsel %vm346, %v175, 0
    %350 = vmatpush.msra.mxu0 0.0
    %351 = vmatpush.msra.mxu0 0.0
    %352 = vmatpush.msra.mxu0 0.0
    %353 = vmatpush.msra.mxu0 0.0
    %354 = vmatpush.msra.mxu0 0.0
    %355 = vmatpush.msra.mxu0 0.0
    %356 = vmatpush.msra.mxu0 0.0
    %357 = vmatpush.msra.mxu0 %v337
    %358 = vmatpush.msra.mxu0 %v321
    %359 = vmatpush.msra.mxu0 %v305
    %360 = vmatpush.msra.mxu0 %v272
    %361 = vmatpush.msra.mxu0 %v54
    %362 = vmatpush.msra.mxu0 %v222
    %363 = vmatpush.msra.mxu0 %v288
    %364 = vmatpush.msra.mxu0 %v255
    %365 = vmatpush.msra.mxu0 %v239
    %366 = vmatmul.f32.gmra.mxu0 %v348
    %v367 = vpop.f32.mrf.mxu0
    %v368 = vadd.f32 %v344, %v367
    %369 = vdwg.mxu0
    %370 = vmatpush.msra.mxu0 0.0
    %371 = vmatpush.msra.mxu0 0.0
    %372 = vmatpush.msra.mxu0 0.0
    %373 = vmatpush.msra.mxu0 0.0
    %374 = vmatpush.msra.mxu0 0.0
    %375 = vmatpush.msra.mxu0 0.0
    %376 = vmatpush.msra.mxu0 0.0
    %377 = vmatpush.msra.mxu0 %v338
    %378 = vmatpush.msra.mxu0 %v322
    %379 = vmatpush.msra.mxu0 %v306
    %380 = vmatpush.msra.mxu0 %v273
    %381 = vmatpush.msra.mxu0 %v55
    %382 = vmatpush.msra.mxu0 %v223
    %383 = vmatpush.msra.mxu0 %v289
    %384 = vmatpush.msra.mxu0 %v256
    %385 = vmatpush.msra.mxu0 %v240
    %386 = vmatmul.f32.gmra.mxu0 %v348
    %v387 = vpop.f32.mrf.mxu0
    %v388 = vadd.f32 %v344, %v387
    %389 = vdwg.mxu0
    %390 = vmatpush.msra.mxu0 0.0
    %391 = vmatpush.msra.mxu0 0.0
    %392 = vmatpush.msra.mxu0 0.0
    %393 = vmatpush.msra.mxu0 0.0
    %394 = vmatpush.msra.mxu0 0.0
    %395 = vmatpush.msra.mxu0 0.0
    %396 = vmatpush.msra.mxu0 0.0
    %397 = vmatpush.msra.mxu0 %v339
    %398 = vmatpush.msra.mxu0 %v323
    %399 = vmatpush.msra.mxu0 %v307
    %400 = vmatpush.msra.mxu0 %v274
    %401 = vmatpush.msra.mxu0 %v56
    %402 = vmatpush.msra.mxu0 %v224
    %403 = vmatpush.msra.mxu0 %v290
    %404 = vmatpush.msra.mxu0 %v257
    %405 = vmatpush.msra.mxu0 %v241
    %406 = vmatmul.f32.gmra.mxu0 %v348
    %v407 = vpop.f32.mrf.mxu0
    %v408 = vadd.f32 %v344, %v407
    %409 = vdwg.mxu0
    %410 = vmatpush.msra.mxu0 0.0
    %411 = vmatpush.msra.mxu0 0.0
    %412 = vmatpush.msra.mxu0 0.0
    %413 = vmatpush.msra.mxu0 0.0
    %414 = vmatpush.msra.mxu0 0.0
    %415 = vmatpush.msra.mxu0 0.0
    %416 = vmatpush.msra.mxu0 0.0
    %417 = vmatpush.msra.mxu0 %v340
    %418 = vmatpush.msra.mxu0 %v324
    %419 = vmatpush.msra.mxu0 %v308
    %420 = vmatpush.msra.mxu0 %v275
    %421 = vmatpush.msra.mxu0 %v57
    %422 = vmatpush.msra.mxu0 %v225
    %423 = vmatpush.msra.mxu0 %v291
    %424 = vmatpush.msra.mxu0 %v258
    %425 = vmatpush.msra.mxu0 %v242
    %426 = vmatmul.f32.gmra.mxu0 %v348
    %v427 = vpop.f32.mrf.mxu0
    %v428 = vadd.f32 %v344, %v427
    %429 = vdwg.mxu0
    %vm430 = vcmp.ge.f32.partialorder %v368, 0.0
    %vm431 = vcmp.ge.f32.partialorder %v388, 0.0
    %vm432 = vcmp.ge.f32.partialorder %v408, 0.0
    %vm433 = vcmp.ge.f32.partialorder %v428, 0.0
    %v434 = vmul.f32 %v368, 0.1
    %v435 = vmul.f32 %v388, 0.1
    %v436 = vmul.f32 %v408, 0.1
    %v437 = vmul.f32 %v428, 0.1
    %v438 = vsel %vm430, %v368, %v434
    %v439 = vsel %vm431, %v388, %v435
    %v440 = vsel %vm432, %v408, %v436
    %v441 = vsel %vm433, %v428, %v437
    %v442 = vld [vmem:[%s3] sm:$0xff]
    %v443 = vld [vmem:[%s4] sm:$0xff]
    %444 = vrot.lane.b32.xlu0 %v438, 1
    %v445 = vpop.permute.xlu0 %444
    %446 = vrot.lane.b32.xlu0 %v439, 1
    %v447 = vpop.permute.xlu0 %446
    %448 = vrot.lane.b32.xlu0 %v440, 1
    %v449 = vpop.permute.xlu0 %448
    %450 = vrot.lane.b32.xlu0 %v441, 1
    %v451 = vpop.permute.xlu0 %450
    %v452 = vsel %vm217, %v449, %v451
    %v453 = vsel %vm217, %v447, %v449
    %v454 = vsel %vm217, %v445, %v447
    %v455 = vsel %vm217, %v451, %v445
    %v456 = vsel %vm181, %v438, %v455
    %v457 = vsel %vm182, %v439, %v454
    %v458 = vsel %vm183, %v440, %v453
    %v459 = vsel %vm184, %v441, %v452
    %460 = vrot.lane.b32.xlu0 %v456, 16
    %v461 = vpop.permute.xlu0 %460
    %462 = vrot.lane.b32.xlu0 %v457, 16
    %v463 = vpop.permute.xlu0 %462
    %464 = vrot.lane.b32.xlu0 %v458, 16
    %v465 = vpop.permute.xlu0 %464
    %466 = vrot.lane.b32.xlu0 %v459, 16
    %v467 = vpop.permute.xlu0 %466
    %v468 = vsel %vm234, %v465, %v467
    %v469 = vsel %vm234, %v463, %v465
    %v470 = vsel %vm234, %v461, %v463
    %v471 = vsel %vm234, %v467, %v461
    %v472 = vsel %vm197, %v456, %v471
    %v473 = vsel %vm198, %v457, %v470
    %v474 = vsel %vm199, %v458, %v469
    %v475 = vsel %vm200, %v459, %v468
    %476 = vrot.lane.b32.xlu0 %v438, 16
    %v477 = vpop.permute.xlu0 %476
    %478 = vrot.lane.b32.xlu0 %v439, 16
    %v479 = vpop.permute.xlu0 %478
    %480 = vrot.lane.b32.xlu0 %v440, 16
    %v481 = vpop.permute.xlu0 %480
    %482 = vrot.lane.b32.xlu0 %v441, 16
    %v483 = vpop.permute.xlu0 %482
    %v484 = vsel %vm234, %v481, %v483
    %v485 = vsel %vm234, %v479, %v481
    %v486 = vsel %vm234, %v477, %v479
    %v487 = vsel %vm234, %v483, %v477
    %v488 = vsel %vm197, %v438, %v487
    %v489 = vsel %vm198, %v439, %v486
    %v490 = vsel %vm199, %v440, %v485
    %v491 = vsel %vm200, %v441, %v484
    %492 = vrot.lane.b32.xlu0 %v438, 127
    %v493 = vpop.permute.xlu0 %492
    %494 = vrot.lane.b32.xlu0 %v439, 127
    %v495 = vpop.permute.xlu0 %494
    %496 = vrot.lane.b32.xlu0 %v440, 127
    %v497 = vpop.permute.xlu0 %496
    %498 = vrot.lane.b32.xlu0 %v441, 127
    %v499 = vpop.permute.xlu0 %498
    %v500 = vsel %vm267, %v497, %v499
    %v501 = vsel %vm267, %v495, %v497
    %v502 = vsel %vm267, %v493, %v495
    %v503 = vsel %vm267, %v499, %v493
    %v504 = vsel %vm189, %v438, %v502
    %v505 = vsel %vm190, %v439, %v501
    %v506 = vsel %vm191, %v440, %v500
    %v507 = vsel %vm192, %v441, %v503
    %508 = vrot.lane.b32.xlu0 %v504, 16
    %v509 = vpop.permute.xlu0 %508
    %510 = vrot.lane.b32.xlu0 %v505, 16
    %v511 = vpop.permute.xlu0 %510
    %512 = vrot.lane.b32.xlu0 %v506, 16
    %v513 = vpop.permute.xlu0 %512
    %514 = vrot.lane.b32.xlu0 %v507, 16
    %v515 = vpop.permute.xlu0 %514
    %v516 = vsel %vm234, %v513, %v515
    %v517 = vsel %vm234, %v511, %v513
    %v518 = vsel %vm234, %v509, %v511
    %v519 = vsel %vm234, %v515, %v509
    %v520 = vsel %vm197, %v504, %v519
    %v521 = vsel %vm198, %v505, %v518
    %v522 = vsel %vm199, %v506, %v517
    %v523 = vsel %vm200, %v507, %v516
    %524 = vrot.lane.b32.xlu0 %v456, 112
    %v525 = vpop.permute.xlu0 %524
    %526 = vrot.lane.b32.xlu0 %v457, 112
    %v527 = vpop.permute.xlu0 %526
    %528 = vrot.lane.b32.xlu0 %v458, 112
    %v529 = vpop.permute.xlu0 %528
    %530 = vrot.lane.b32.xlu0 %v459, 112
    %v531 = vpop.permute.xlu0 %530
    %v532 = vsel %vm300, %v529, %v531
    %v533 = vsel %vm300, %v527, %v529
    %v534 = vsel %vm300, %v525, %v527
    %v535 = vsel %vm300, %v531, %v525
    %v536 = vsel %vm205, %v456, %v534
    %v537 = vsel %vm206, %v457, %v533
    %v538 = vsel %vm207, %v458, %v532
    %v539 = vsel %vm208, %v459, %v535
    %540 = vrot.lane.b32.xlu0 %v438, 112
    %v541 = vpop.permute.xlu0 %540
    %542 = vrot.lane.b32.xlu0 %v439, 112
    %v543 = vpop.permute.xlu0 %542
    %544 = vrot.lane.b32.xlu0 %v440, 112
    %v545 = vpop.permute.xlu0 %544
    %546 = vrot.lane.b32.xlu0 %v441, 112
    %v547 = vpop.permute.xlu0 %546
    %v548 = vsel %vm300, %v545, %v547
    %v549 = vsel %vm300, %v543, %v545
    %v550 = vsel %vm300, %v541, %v543
    %v551 = vsel %vm300, %v547, %v541
    %v552 = vsel %vm205, %v438, %v550
    %v553 = vsel %vm206, %v439, %v549
    %v554 = vsel %vm207, %v440, %v548
    %v555 = vsel %vm208, %v441, %v551
    %556 = vrot.lane.b32.xlu0 %v504, 112
    %v557 = vpop.permute.xlu0 %556
    %558 = vrot.lane.b32.xlu0 %v505, 112
    %v559 = vpop.permute.xlu0 %558
    %560 = vrot.lane.b32.xlu0 %v506, 112
    %v561 = vpop.permute.xlu0 %560
    %562 = vrot.lane.b32.xlu0 %v507, 112
    %v563 = vpop.permute.xlu0 %562
    %v564 = vsel %vm300, %v561, %v563
    %v565 = vsel %vm300, %v559, %v561
    %v566 = vsel %vm300, %v557, %v559
    %v567 = vsel %vm300, %v563, %v557
    %v568 = vsel %vm205, %v504, %v566
    %v569 = vsel %vm206, %v505, %v565
    %v570 = vsel %vm207, %v506, %v564
    %v571 = vsel %vm208, %v507, %v567
    %573 = vset.pattern.permute.xlu0 0
    %574 = vperm.xlu0 %573, %v443
    %v575 = vpop.permute.xlu0 %574
    %v578 = vsel %vm346, %v442, 0
    %580 = vmatpush.msra.mxu0 0.0
    %581 = vmatpush.msra.mxu0 0.0
    %582 = vmatpush.msra.mxu0 0.0
    %583 = vmatpush.msra.mxu0 0.0
    %584 = vmatpush.msra.mxu0 0.0
    %585 = vmatpush.msra.mxu0 0.0
    %586 = vmatpush.msra.mxu0 0.0
    %587 = vmatpush.msra.mxu0 %v568
    %588 = vmatpush.msra.mxu0 %v552
    %589 = vmatpush.msra.mxu0 %v536
    %590 = vmatpush.msra.mxu0 %v504
    %591 = vmatpush.msra.mxu0 %v438
    %592 = vmatpush.msra.mxu0 %v456
    %593 = vmatpush.msra.mxu0 %v520
    %594 = vmatpush.msra.mxu0 %v488
    %595 = vmatpush.msra.mxu0 %v472
    %596 = vmatmul.f32.gmra.mxu0 %v578
    %v597 = vpop.f32.mrf.mxu0
    %v598 = vadd.f32 %v575, %v597
    %599 = vdwg.mxu0
    %600 = vmatpush.msra.mxu0 0.0
    %601 = vmatpush.msra.mxu0 0.0
    %602 = vmatpush.msra.mxu0 0.0
    %603 = vmatpush.msra.mxu0 0.0
    %604 = vmatpush.msra.mxu0 0.0
    %605 = vmatpush.msra.mxu0 0.0
    %606 = vmatpush.msra.mxu0 0.0
    %607 = vmatpush.msra.mxu0 %v569
    %608 = vmatpush.msra.mxu0 %v553
    %609 = vmatpush.msra.mxu0 %v537
    %610 = vmatpush.msra.mxu0 %v505
    %611 = vmatpush.msra.mxu0 %v439
    %612 = vmatpush.msra.mxu0 %v457
    %613 = vmatpush.msra.mxu0 %v521
    %614 = vmatpush.msra.mxu0 %v489
    %615 = vmatpush.msra.mxu0 %v473
    %616 = vmatmul.f32.gmra.mxu0 %v578
    %v617 = vpop.f32.mrf.mxu0
    %v618 = vadd.f32 %v575, %v617
    %619 = vdwg.mxu0
    %620 = vmatpush.msra.mxu0 0.0
    %621 = vmatpush.msra.mxu0 0.0
    %622 = vmatpush.msra.mxu0 0.0
    %623 = vmatpush.msra.mxu0 0.0
    %624 = vmatpush.msra.mxu0 0.0
    %625 = vmatpush.msra.mxu0 0.0
    %626 = vmatpush.msra.mxu0 0.0
    %627 = vmatpush.msra.mxu0 %v570
    %628 = vmatpush.msra.mxu0 %v554
    %629 = vmatpush.msra.mxu0 %v538
    %630 = vmatpush.msra.mxu0 %v506
    %631 = vmatpush.msra.mxu0 %v440
    %632 = vmatpush.msra.mxu0 %v458
    %633 = vmatpush.msra.mxu0 %v522
    %634 = vmatpush.msra.mxu0 %v490
    %635 = vmatpush.msra.mxu0 %v474
    %636 = vmatmul.f32.gmra.mxu0 %v578
    %v637 = vpop.f32.mrf.mxu0
    %v638 = vadd.f32 %v575, %v637
    %639 = vdwg.mxu0
    %640 = vmatpush.msra.mxu0 0.0
    %641 = vmatpush.msra.mxu0 0.0
    %642 = vmatpush.msra.mxu0 0.0
    %643 = vmatpush.msra.mxu0 0.0
    %644 = vmatpush.msra.mxu0 0.0
    %645 = vmatpush.msra.mxu0 0.0
    %646 = vmatpush.msra.mxu0 0.0
    %647 = vmatpush.msra.mxu0 %v571
    %648 = vmatpush.msra.mxu0 %v555
    %649 = vmatpush.msra.mxu0 %v539
    %650 = vmatpush.msra.mxu0 %v507
    %651 = vmatpush.msra.mxu0 %v441
    %652 = vmatpush.msra.mxu0 %v459
    %653 = vmatpush.msra.mxu0 %v523
    %654 = vmatpush.msra.mxu0 %v491
    %655 = vmatpush.msra.mxu0 %v475
    %656 = vmatmul.f32.gmra.mxu0 %v578
    %v657 = vpop.f32.mrf.mxu0
    %v658 = vadd.f32 %v575, %v657
    %659 = vdwg.mxu0
    %vm660 = vcmp.ge.f32.partialorder %v598, 0.0
    %vm661 = vcmp.ge.f32.partialorder %v618, 0.0
    %vm662 = vcmp.ge.f32.partialorder %v638, 0.0
    %vm663 = vcmp.ge.f32.partialorder %v658, 0.0
    %v664 = vmul.f32 %v598, 0.1
    %v665 = vmul.f32 %v618, 0.1
    %v666 = vmul.f32 %v638, 0.1
    %v667 = vmul.f32 %v658, 0.1
    %v668 = vsel %vm660, %v598, %v664
    %v669 = vsel %vm661, %v618, %v665
    %v670 = vsel %vm662, %v638, %v666
    %v671 = vsel %vm663, %v658, %v667
    %672 = vrot.lane.b32.xlu0 %v668, 127
    %v673 = vpop.permute.xlu0 %672
    %674 = vrot.lane.b32.xlu0 %v669, 127
    %v675 = vpop.permute.xlu0 %674
    %676 = vrot.lane.b32.xlu0 %v670, 127
    %v677 = vpop.permute.xlu0 %676
    %678 = vrot.lane.b32.xlu0 %v671, 127
    %v679 = vpop.permute.xlu0 %678
    %v680 = vsel %vm267, %v677, %v679
    %v681 = vsel %vm267, %v675, %v677
    %v682 = vsel %vm267, %v673, %v675
    %v683 = vsel %vm267, %v679, %v673
    %v684 = vmax.f32 %v668, %v682
    %v685 = vmax.f32 %v669, %v681
    %v686 = vmax.f32 %v670, %v680
    %v687 = vmax.f32 %v671, %v683
    %688 = vrot.lane.b32.xlu0 %v684, 112
    %v689 = vpop.permute.xlu0 %688
    %690 = vrot.lane.b32.xlu0 %v685, 112
    %v691 = vpop.permute.xlu0 %690
    %692 = vrot.lane.b32.xlu0 %v686, 112
    %v693 = vpop.permute.xlu0 %692
    %694 = vrot.lane.b32.xlu0 %v687, 112
    %v695 = vpop.permute.xlu0 %694
    %v696 = vsel %vm300, %v693, %v695
    %v697 = vsel %vm300, %v691, %v693
    %v698 = vsel %vm300, %v689, %v691
    %v699 = vsel %vm300, %v695, %v689
    %v700 = vmax.f32 %v684, %v698
    %v701 = vmax.f32 %v685, %v697
    %v702 = vmax.f32 %v686, %v696
    %v703 = vmax.f32 %v687, %v699
    %v704 = vld [vmem:[#allocation5] sm:$0xff]
    %v705 = vld [vmem:[#allocation5 + $0x8] sm:$0xff]
    %v706 = vld [vmem:[#allocation5 + $0x10] sm:$0xff]
    %v707 = vld [vmem:[#allocation5 + $0x18] sm:$0xff]
    %v708 = vld [vmem:[#allocation5 + $0x20] sm:$0xff]
    %v709 = vld [vmem:[#allocation5 + $0x28] sm:$0xff]
    %v710 = vld [vmem:[#allocation5 + $0x30] sm:$0xff]
    %v711 = vld [vmem:[#allocation5 + $0x38] sm:$0xff]
    %v712 = vld [vmem:[#allocation5 + $0x40] sm:$0xff]
    %v713 = vld [vmem:[#allocation5 + $0x48] sm:$0xff]
    %v714 = vld [vmem:[#allocation5 + $0x50] sm:$0xff]
    %v715 = vld [vmem:[#allocation5 + $0x58] sm:$0xff]
    %v716 = vld [vmem:[#allocation5 + $0x60] sm:$0xff]
    %v717 = vld [vmem:[#allocation5 + $0x68] sm:$0xff]
    %v718 = vld [vmem:[#allocation5 + $0x70] sm:$0xff]
    %v719 = vld [vmem:[#allocation5 + $0x78] sm:$0xff]
    %v720 = vld [vmem:[#allocation5 + $0x80] sm:$0xff]
    %v721 = vld [vmem:[#allocation5 + $0x88] sm:$0xff]
    %v722 = vld [vmem:[#allocation5 + $0x90] sm:$0xff]
    %v723 = vld [vmem:[#allocation5 + $0x98] sm:$0xff]
    %v724 = vld [vmem:[#allocation5 + $0xa0] sm:$0xff]
    %v725 = vld [vmem:[#allocation5 + $0xa8] sm:$0xff]
    %v726 = vld [vmem:[#allocation5 + $0xb0] sm:$0xff]
    %v727 = vld [vmem:[#allocation5 + $0xb8] sm:$0xff]
    %v728 = vld [vmem:[#allocation5 + $0xc0] sm:$0xff]
    %v729 = vld [vmem:[#allocation5 + $0xc8] sm:$0xff]
    %v730 = vld [vmem:[#allocation5 + $0xd0] sm:$0xff]
    %v731 = vld [vmem:[#allocation5 + $0xd8] sm:$0xff]
    %v732 = vld [vmem:[#allocation5 + $0xe0] sm:$0xff]
    %v733 = vld [vmem:[#allocation5 + $0xe8] sm:$0xff]
    %v734 = vld [vmem:[#allocation5 + $0xf0] sm:$0xff]
    %v735 = vld [vmem:[#allocation5 + $0xf8] sm:$0xff]
    %v736 = vld [vmem:[#allocation5 + $0x100] sm:$0xff]
    %v737 = vld [vmem:[#allocation5 + $0x108] sm:$0xff]
    %v738 = vld [vmem:[#allocation5 + $0x110] sm:$0xff]
    %v739 = vld [vmem:[#allocation5 + $0x118] sm:$0xff]
    %v740 = vld [vmem:[#allocation5 + $0x120] sm:$0xff]
    %v741 = vld [vmem:[#allocation5 + $0x128] sm:$0xff]
    %v742 = vld [vmem:[#allocation5 + $0x130] sm:$0xff]
    %v743 = vld [vmem:[#allocation5 + $0x138] sm:$0xff]
    %v744 = vld [vmem:[#allocation5 + $0x140] sm:$0xff]
    %v745 = vld [vmem:[#allocation5 + $0x148] sm:$0xff]
    %v746 = vld [vmem:[#allocation5 + $0x150] sm:$0xff]
    %v747 = vld [vmem:[#allocation5 + $0x158] sm:$0xff]
    %v748 = vld [vmem:[#allocation5 + $0x160] sm:$0xff]
    %v749 = vld [vmem:[#allocation5 + $0x168] sm:$0xff]
    %v750 = vld [vmem:[#allocation5 + $0x170] sm:$0xff]
    %v751 = vld [vmem:[#allocation5 + $0x178] sm:$0xff]
    %v752 = vld [vmem:[#allocation5 + $0x180] sm:$0xff]
    %v753 = vld [vmem:[#allocation5 + $0x188] sm:$0xff]
    %v754 = vld [vmem:[#allocation5 + $0x190] sm:$0xff]
    %v755 = vld [vmem:[#allocation5 + $0x198] sm:$0xff]
    %v756 = vld [vmem:[#allocation5 + $0x1a0] sm:$0xff]
    %v757 = vld [vmem:[#allocation5 + $0x1a8] sm:$0xff]
    %v758 = vld [vmem:[#allocation5 + $0x1b0] sm:$0xff]
    %v759 = vld [vmem:[#allocation5 + $0x1b8] sm:$0xff]
    %v760 = vld [vmem:[#allocation5 + $0x1c0] sm:$0xff]
    %v761 = vld [vmem:[#allocation5 + $0x1c8] sm:$0xff]
    %v762 = vld [vmem:[#allocation5 + $0x1d0] sm:$0xff]
    %v763 = vld [vmem:[#allocation5 + $0x1d8] sm:$0xff]
    %v764 = vld [vmem:[#allocation5 + $0x1e0] sm:$0xff]
    %v765 = vld [vmem:[#allocation5 + $0x1e8] sm:$0xff]
    %v766 = vld [vmem:[#allocation5 + $0x1f0] sm:$0xff]
    %v767 = vld [vmem:[#allocation5 + $0x1f8] sm:$0xff]
    %768 = vmatpush.msra.mxu0 %v719
    %769 = vmatpush.msra.mxu0 %v718
    %770 = vmatpush.msra.mxu0 %v717
    %771 = vmatpush.msra.mxu0 %v716
    %772 = vmatpush.msra.mxu0 %v715
    %773 = vmatpush.msra.mxu0 %v714
    %774 = vmatpush.msra.mxu0 %v713
    %775 = vmatpush.msra.mxu0 %v712
    %776 = vmatpush.msra.mxu0 %v711
    %777 = vmatpush.msra.mxu0 %v710
    %778 = vmatpush.msra.mxu0 %v709
    %779 = vmatpush.msra.mxu0 %v708
    %780 = vmatpush.msra.mxu0 %v707
    %781 = vmatpush.msra.mxu0 %v706
    %782 = vmatpush.msra.mxu0 %v705
    %783 = vmatpush.msra.mxu0 %v704
    %784 = vmatmul.f32.gmra.mxu0 %v700
    %v785 = vpop.f32.mrf.mxu0
    %v786 = vadd.f32 0.0, %v785
    %787 = vdwg.mxu0
    %788 = vmatpush.msra.mxu0 %v735
    %789 = vmatpush.msra.mxu0 %v734
    %790 = vmatpush.msra.mxu0 %v733
    %791 = vmatpush.msra.mxu0 %v732
    %792 = vmatpush.msra.mxu0 %v731
    %793 = vmatpush.msra.mxu0 %v730
    %794 = vmatpush.msra.mxu0 %v729
    %795 = vmatpush.msra.mxu0 %v728
    %796 = vmatpush.msra.mxu0 %v727
    %797 = vmatpush.msra.mxu0 %v726
    %798 = vmatpush.msra.mxu0 %v725
    %799 = vmatpush.msra.mxu0 %v724
    %800 = vmatpush.msra.mxu0 %v723
    %801 = vmatpush.msra.mxu0 %v722
    %802 = vmatpush.msra.mxu0 %v721
    %803 = vmatpush.msra.mxu0 %v720
    %804 = vmatmul.f32.gmra.mxu0 %v701
    %v805 = vpop.f32.mrf.mxu0
    %v806 = vadd.f32 %v786, %v805
    %807 = vdwg.mxu0
    %808 = vmatpush.msra.mxu0 %v751
    %809 = vmatpush.msra.mxu0 %v750
    %810 = vmatpush.msra.mxu0 %v749
    %811 = vmatpush.msra.mxu0 %v748
    %812 = vmatpush.msra.mxu0 %v747
    %813 = vmatpush.msra.mxu0 %v746
    %814 = vmatpush.msra.mxu0 %v745
    %815 = vmatpush.msra.mxu0 %v744
    %816 = vmatpush.msra.mxu0 %v743
    %817 = vmatpush.msra.mxu0 %v742
    %818 = vmatpush.msra.mxu0 %v741
    %819 = vmatpush.msra.mxu0 %v740
    %820 = vmatpush.msra.mxu0 %v739
    %821 = vmatpush.msra.mxu0 %v738
    %822 = vmatpush.msra.mxu0 %v737
    %823 = vmatpush.msra.mxu0 %v736
    %824 = vmatmul.f32.gmra.mxu0 %v702
    %v825 = vpop.f32.mrf.mxu0
    %v826 = vadd.f32 %v806, %v825
    %827 = vdwg.mxu0
    %828 = vmatpush.msra.mxu0 %v767
    %829 = vmatpush.msra.mxu0 %v766
    %830 = vmatpush.msra.mxu0 %v765
    %831 = vmatpush.msra.mxu0 %v764
    %832 = vmatpush.msra.mxu0 %v763
    %833 = vmatpush.msra.mxu0 %v762
    %834 = vmatpush.msra.mxu0 %v761
    %835 = vmatpush.msra.mxu0 %v760
    %836 = vmatpush.msra.mxu0 %v759
    %837 = vmatpush.msra.mxu0 %v758
    %838 = vmatpush.msra.mxu0 %v757
    %839 = vmatpush.msra.mxu0 %v756
    %840 = vmatpush.msra.mxu0 %v755
    %841 = vmatpush.msra.mxu0 %v754
    %842 = vmatpush.msra.mxu0 %v753
    %843 = vmatpush.msra.mxu0 %v752
    %844 = vmatmul.f32.gmra.mxu0 %v703
    %v845 = vpop.f32.mrf.mxu0
    %v846 = vadd.f32 %v826, %v845
    %847 = vdwg.mxu0
    %848 = vst [vmem:[#allocation7] sm:$0xff] %v846
    // Predicated region
    $region34: #{tpu_custom_call.1} parent=1 // pred_check
      _
    $region35: #{tpu_custom_call.1} parent=1 // pred_check_branch
      %850 = sbr.rel (0) target = $region37
    $region36: #{tpu_custom_call.1} parent=1 // pred_region
      %852 = vsyncadd [#allocation4], 0
      %s854 = sshll.u32 [#allocation7], 4
      %s855 = int_to_ptr.vmem [resolvable:$true] %s854
      %s856 = sshll.u32 %s6, 4
      %s857 = int_to_ptr.hbm [resolvable:$true] %s856
      %859 = dma.vmem_to_hbm [thread:$0]  %s855, 128, %s857, [#allocation4]
    $region37: #{tpu_custom_call.1} parent=1 // pred_fallthru
      _
    // Predicated region
    $region38: #{tpu_custom_call.1} parent=1 // pred_check
      _
    $region39: #{tpu_custom_call.1} parent=1 // pred_check_branch
      %861 = sbr.rel (0) target = $region41
    $region40: #{tpu_custom_call.1} parent=1 // pred_region
      %863 = dma.done [#allocation4], 128
    $region41: #{tpu_custom_call.1} parent=1 // pred_fallthru
      _
    %864 = vsyncpa [#allocation3], 1
    %865 = vsyncpa [#allocation6], 1
    %866 = vsyncpa [#allocation4], 1

</llo_original>
